<compile_context>
chip_gen: v7x
topology: tpu7x:2x2x1
jax: 0.10.0
libtpu: 0.0.40
codegen_flags: <defaults>
</compile_context>

<pallas_src>
import functools

import jax
import jax.numpy as jnp
from jax import lax
from jax.experimental import pallas as pl
from jax.experimental.pallas import tpu as pltpu


_VMEM_LIMIT_BYTES = 32 * 1024 * 1024       # scoped VMEM we request (safe on v5e/v6e/v7x)
_VMEM_TILE_BUDGET = 20 * 1024 * 1024       # headroom under that limit for tiles + temps
_Q_RESIDENT_BUDGET = 12 * 1024 * 1024      # max (double-buffered) bytes for resident q^T


def _nce_loss_kernel(k_ref, qt_ref, row_loss_ref, m_ref, l_ref, diag_ref, *,
                     inv_temperature, block_m, block_n, n_valid, padded, q_resident):
    i = pl.program_id(0)
    j = pl.program_id(1)
    n_col = pl.num_programs(1)

    # Init running logsumexp / diagonal state at the first column tile of each row tile.
    @pl.when(j == 0)
    def _():
        m_ref[...] = jnp.full(m_ref.shape, -jnp.inf, dtype=jnp.float32)
        l_ref[...] = jnp.zeros(l_ref.shape, dtype=jnp.float32)
        diag_ref[...] = jnp.zeros(diag_ref.shape, dtype=jnp.float32)

    if q_resident:
        # q^T lives fully in VMEM (loaded once); slice the current column tile.
        col_off = pl.multiple_of(j * block_n, block_n)
        qt = qt_ref[:, pl.ds(col_off, block_n)]
    else:
        qt = qt_ref[...]

    # (TM, TN) logits block on the MXU in the input dtype with f32 accumulation.
    # Temperature is applied to the f32 result (free VALU mul, no input rounding).
    s = jnp.dot(k_ref[...], qt, preferred_element_type=jnp.float32)
    s = s * inv_temperature

    row_start = i * block_m
    col_start = j * block_n

    if padded:
        # Padded columns (global index >= n_valid) must not contribute to the softmax.
        cols_g = lax.broadcasted_iota(jnp.int32, s.shape, 1) + col_start
        s = jnp.where(cols_g < n_valid, s, -jnp.inf)

    # Streaming (online) logsumexp across column tiles.
    m_old = m_ref[...]
    m_new = jnp.maximum(m_old, jnp.max(s, axis=-1, keepdims=True))
    alpha = jnp.exp(m_old - m_new)
    l_ref[...] = alpha * l_ref[...] + jnp.sum(jnp.exp(s - m_new), axis=-1,
                                              keepdims=True)
    m_ref[...] = m_new

    # Positive-pair (diagonal) logit, taken from the same MXU-computed block so it is
    # numerically consistent with the lse path.  Only the overlapping column tile pays
    # the O(TM*TN) mask work (the pl.when condition is pure grid-index arithmetic).
    @pl.when(jnp.logical_and(row_start < col_start + block_n,
                             col_start < row_start + block_m))
    def _():
        rows_g = lax.broadcasted_iota(jnp.int32, s.shape, 0) + row_start
        cols_g = lax.broadcasted_iota(jnp.int32, s.shape, 1) + col_start
        diag_ref[...] = diag_ref[...] + jnp.sum(
            jnp.where(rows_g == cols_g, s, 0.0), axis=-1, keepdims=True)

    # Finalize this row tile: per-row loss = logsumexp - diagonal logit.
    @pl.when(j == n_col - 1)
    def _():
        row_loss_ref[...] = m_ref[...] + jnp.log(l_ref[...]) - diag_ref[...]


def _vmem_estimate(n_pad, d, bm, bn, itemsize, q_resident):
    """Conservative per-step VMEM estimate (double-buffered inputs + f32 temporaries)."""
    q_bytes = 2 * d * (n_pad if q_resident else bn) * itemsize
    k_bytes = 2 * bm * d * itemsize
    out_bytes = 2 * bm * 4
    scratch_bytes = 3 * bm * 4
    interm_bytes = 3 * bm * bn * 4          # s / exp / rescale temporaries
    return q_bytes + k_bytes + out_bytes + scratch_bytes + interm_bytes


def _select_tiles(n_pad, d, itemsize, q_resident):
    """Pick (block_m, block_n): big row tiles to amortize q^T streaming, big column
    tiles to cut per-step overhead, all under the VMEM budget, and always >= 2 row
    tiles so the 'parallel' row axis still shards across both v7x TensorCores."""
    bm_cands = [c for c in (1024, 512, 256, 128, 64, 32, 16, 8)
                if n_pad % c == 0 and n_pad // c >= 2]
    if not bm_cands:                         # n_pad >= 128, so this never triggers
        bm_cands = [n_pad]
    bn_pref = (2048, 1024, 512, 256, 128) if d <= 128 else (1024, 512, 256, 128)
    bn_cands = [c for c in bn_pref if n_pad % c == 0] or [n_pad]
    for bm in bm_cands:
        for bn in bn_cands:
            if _vmem_estimate(n_pad, d, bm, bn, itemsize, q_resident) <= _VMEM_TILE_BUDGET:
                return bm, bn
    return bm_cands[-1], bn_cands[-1]


def nce_loss(k, q, temperature, *, block_m=None, block_n=None, q_resident=None):
    """Pallas implementation of NCELoss.forward(k, q)."""
    assert k.ndim == 2 and q.ndim == 2 and k.shape == q.shape
    n, d = k.shape
    itemsize = jnp.dtype(k.dtype).itemsize
    inv_t = 1.0 / float(temperature)

    # Pad N up to a lane multiple so column tiles are always 128-aligned (no
    # full-extent fallback for awkward N).  Padded columns are masked to -inf in the
    # kernel; padded rows are dropped from the mean below.
    n_pad = ((n + 127) // 128) * 128
    padded = n_pad != n
    if padded:
        k_p = jnp.pad(k, ((0, n_pad - n), (0, 0)))
        q_p = jnp.pad(q, ((0, n_pad - n), (0, 0)))
    else:
        k_p, q_p = k, q

    if q_resident is None:
        q_resident = (2 * n_pad * d * itemsize) <= _Q_RESIDENT_BUDGET

    if block_m is None or block_n is None:
        bm_auto, bn_auto = _select_tiles(n_pad, d, itemsize, q_resident)
        block_m = block_m or bm_auto
        block_n = block_n or bn_auto
    assert n_pad % block_m == 0 and n_pad % block_n == 0

    # Layout plumbing in the wrapper (cheap XLA op) so the kernel never transposes.
    q_t = q_p.T  # (d, n_pad)

    if q_resident:
        # DMA'd once for the whole kernel (constant index_map); sliced in-kernel.
        qt_spec = pl.BlockSpec((d, n_pad), lambda i, j: (0, 0))
        q_read_bytes = n_pad * d * itemsize
    else:
        # Streamed column tiles; re-read once per row tile.
        qt_spec = pl.BlockSpec((d, block_n), lambda i, j: (0, j))
        q_read_bytes = n_pad * d * itemsize * (n_pad // block_m)

    cost = pl.CostEstimate(
        flops=2 * n_pad * n_pad * d,
        transcendentals=n_pad * n_pad,
        bytes_accessed=int(n_pad * d * itemsize + q_read_bytes + n_pad * 4))

    grid = (n_pad // block_m, n_pad // block_n)
    kernel = functools.partial(
        _nce_loss_kernel, inv_temperature=inv_t, block_m=block_m, block_n=block_n,
        n_valid=n, padded=padded, q_resident=q_resident)

    row_losses = pl.pallas_call(
        kernel,
        out_shape=jax.ShapeDtypeStruct((n_pad, 1), jnp.float32),
        grid_spec=pltpu.PrefetchScalarGridSpec(
            num_scalar_prefetch=0,
            grid=grid,
            in_specs=[
                pl.BlockSpec((block_m, d), lambda i, j: (i, 0)),  # k row tile
                qt_spec,                                          # q^T (resident/streamed)
            ],
            out_specs=pl.BlockSpec((block_m, 1), lambda i, j: (i, 0)),
            scratch_shapes=[
                pltpu.VMEM((block_m, 1), jnp.float32),  # running max
                pltpu.VMEM((block_m, 1), jnp.float32),  # running sum of exp
                pltpu.VMEM((block_m, 1), jnp.float32),  # positive-pair (diagonal) logit
            ],
        ),
        compiler_params=pltpu.CompilerParams(
            dimension_semantics=("parallel", "arbitrary"),
            vmem_limit_bytes=_VMEM_LIMIT_BYTES),
        cost_estimate=cost,
    )(k_p, q_t)

    # Tiny final reduction (mean over the N real rows) in plain XLA.
    return jnp.sum(row_losses[:n]) / n


def _nce_loss_ref(k, q, temperature):
    """Pure-JAX reference matching the PyTorch module."""
    logits = (k.astype(jnp.float32) @ q.astype(jnp.float32).T) / temperature
    logp = jax.nn.log_softmax(logits, axis=-1)
    idx = jnp.arange(k.shape[0])
    return -jnp.mean(logp[idx, idx])


if __name__ == "__main__":
    key = jax.random.PRNGKey(0)
    k_key, q_key = jax.random.split(key)
    temperature = 0.07

    # Case 1: multiple row and column tiles; VMEM-resident q^T sliced in-kernel.
    N, D = 256, 32
    k = jax.random.normal(k_key, (N, D), dtype=jnp.float32)
    q = jax.random.normal(q_key, (N, D), dtype=jnp.float32)
    loss = jax.block_until_ready(nce_loss(k, q, temperature,
                                          block_m=128, block_n=128))
    ref = _nce_loss_ref(k, q, temperature)
    assert jnp.allclose(loss, ref, rtol=5e-4, atol=5e-4), (loss, ref)

    # Case 2: streamed (non-resident) q^T path + row/column padding (N=64 -> 128).
    N2, D2 = 64, 32
    k2 = jax.random.normal(jax.random.fold_in(k_key, 1), (N2, D2), dtype=jnp.float32)
    q2 = jax.random.normal(jax.random.fold_in(q_key, 1), (N2, D2), dtype=jnp.float32)
    loss2 = jax.block_until_ready(nce_loss(k2, q2, temperature, q_resident=False))
    ref2 = _nce_loss_ref(k2, q2, temperature)
    assert jnp.allclose(loss2, ref2, rtol=5e-4, atol=5e-4), (loss2, ref2)

    # Case 3: awkward N (not a multiple of 128) exercises the padding/masking path.
    N3, D3 = 200, 32
    k3 = jax.random.normal(jax.random.fold_in(k_key, 2), (N3, D3), dtype=jnp.float32)
    q3 = jax.random.normal(jax.random.fold_in(q_key, 2), (N3, D3), dtype=jnp.float32)
    loss3 = jax.block_until_ready(nce_loss(k3, q3, temperature))
    ref3 = _nce_loss_ref(k3, q3, temperature)
    assert jnp.allclose(loss3, ref3, rtol=5e-4, atol=5e-4), (loss3, ref3)

    print("KERNEL_OK")
</pallas_src>

<mosaic_0001>
module attributes {stable_mosaic.version = 11 : i64} {
  func.func @_nce_loss_kernel(%arg0: i32, %arg1: i32, %arg2: memref<128x32xf32, #tpu.memory_space<vmem>>, %arg3: memref<32x256xf32, #tpu.memory_space<vmem>>, %arg4: memref<128x1xf32, #tpu.memory_space<vmem>>, %arg5: memref<128x1xf32, #tpu.memory_space<vmem>>, %arg6: memref<128x1xf32, #tpu.memory_space<vmem>>, %arg7: memref<128x1xf32, #tpu.memory_space<vmem>>) attributes {dimension_semantics = [#tpu.dimension_semantics<parallel>, #tpu.dimension_semantics<arbitrary>], iteration_bounds = array<i64: 2, 2>, scalar_prefetch = 0 : i64, scratch_operands = 3 : i64, tpu.core_type = #tpu.core_type<tc>, window_params = [{transform_indices = @transform_0, window_bounds = array<i64: 128, 32>}, {pipeline_mode = #tpu.pipeline_mode<synchronous>, transform_indices = @transform_1, window_bounds = array<i64: 32, 256>}, {transform_indices = @transform_2, window_bounds = array<i64: 128, 1>}]} {
    %c0_i32 = arith.constant 0 : i32
    %0 = arith.cmpi eq, %arg1, %c0_i32 : i32
    %1 = arith.extui %0 : i1 to i32
    %c0_i32_0 = arith.constant 0 : i32
    %2 = arith.cmpi ne, %1, %c0_i32_0 : i32
    scf.if %2 {
      %cst_20 = arith.constant 0xFF800000 : f32
      %39 = vector.broadcast %cst_20 : f32 to vector<128x1xf32>
      %c0_21 = arith.constant 0 : index
      %c0_22 = arith.constant 0 : index
      %40 = vector.load %arg5[%c0_21, %c0_22] : memref<128x1xf32, #tpu.memory_space<vmem>>, vector<128x1xf32>
      tpu.vector_store %arg5[%c0_21, %c0_22], %39 {strides = array<i32>} : memref<128x1xf32, #tpu.memory_space<vmem>>, vector<128x1xf32>,
      %cst_23 = arith.constant 0.000000e+00 : f32
      %41 = vector.broadcast %cst_23 : f32 to vector<128x1xf32>
      %c0_24 = arith.constant 0 : index
      %c0_25 = arith.constant 0 : index
      %42 = vector.load %arg6[%c0_24, %c0_25] : memref<128x1xf32, #tpu.memory_space<vmem>>, vector<128x1xf32>
      tpu.vector_store %arg6[%c0_24, %c0_25], %41 {strides = array<i32>} : memref<128x1xf32, #tpu.memory_space<vmem>>, vector<128x1xf32>,
      %cst_26 = arith.constant 0.000000e+00 : f32
      %43 = vector.broadcast %cst_26 : f32 to vector<128x1xf32>
      %c0_27 = arith.constant 0 : index
      %c0_28 = arith.constant 0 : index
      %44 = vector.load %arg7[%c0_27, %c0_28] : memref<128x1xf32, #tpu.memory_space<vmem>>, vector<128x1xf32>
      tpu.vector_store %arg7[%c0_27, %c0_28], %43 {strides = array<i32>} : memref<128x1xf32, #tpu.memory_space<vmem>>, vector<128x1xf32>,
    } else {
    }
    %c128_i32 = arith.constant 128 : i32
    %3 = arith.muli %arg1, %c128_i32 : i32
    %4 = tpu.assume_multiple %3, 128 : i32
    %c0 = arith.constant 0 : index
    %5 = arith.index_cast %4 : i32 to index
    %6 = vector.load %arg3[%c0, %5] : memref<32x256xf32, #tpu.memory_space<vmem>>, vector<32x128xf32>
    %c0_1 = arith.constant 0 : index
    %c0_2 = arith.constant 0 : index
    %7 = vector.load %arg2[%c0_1, %c0_2] : memref<128x32xf32, #tpu.memory_space<vmem>>, vector<128x32xf32>
    %cst = arith.constant dense<0.000000e+00> : vector<128x128xf32>
    %8 = tpu.matmul %7, %6, %cst {dimension_numbers = #tpu.dot_dimension_numbers<[1], [0], [0], [1], [0, 0, 1, 1], [], []>} : vector<128x32xf32>, vector<32x128xf32>, vector<128x128xf32> -> vector<128x128xf32>
    %cst_3 = arith.constant 14.2857141 : f32
    %9 = vector.broadcast %cst_3 : f32 to vector<128x128xf32>
    %10 = arith.mulf %8, %9 : vector<128x128xf32>
    %c128_i32_4 = arith.constant 128 : i32
    %11 = arith.muli %arg0, %c128_i32_4 : i32
    %c128_i32_5 = arith.constant 128 : i32
    %12 = arith.muli %arg1, %c128_i32_5 : i32
    %c0_6 = arith.constant 0 : index
    %c0_7 = arith.constant 0 : index
    %13 = vector.load %arg5[%c0_6, %c0_7] : memref<128x1xf32, #tpu.memory_space<vmem>>, vector<128x1xf32>
    %cst_8 = arith.constant dense<0xFF800000> : vector<128xf32>
    %14 = vector.multi_reduction <maximumf>, %10, %cst_8 [1] : vector<128x128xf32> to vector<128xf32>
    %15 = vector.shape_cast %14 : vector<128xf32> to vector<128x1xf32>
    %16 = arith.maximumf %13, %15 : vector<128x1xf32>
    %17 = arith.subf %13, %16 : vector<128x1xf32>
    %18 = math.exp %17 : vector<128x1xf32>
    %c0_9 = arith.constant 0 : index
    %c0_10 = arith.constant 0 : index
    %19 = vector.load %arg6[%c0_9, %c0_10] : memref<128x1xf32, #tpu.memory_space<vmem>>, vector<128x1xf32>
    %20 = arith.mulf %18, %19 : vector<128x1xf32>
    %21 = vector.broadcast %16 : vector<128x1xf32> to vector<128x128xf32>
    %22 = arith.subf %10, %21 : vector<128x128xf32>
    %23 = math.exp %22 : vector<128x128xf32>
    %cst_11 = arith.constant dense<0.000000e+00> : vector<128xf32>
    %24 = vector.multi_reduction <add>, %23, %cst_11 [1] : vector<128x128xf32> to vector<128xf32>
    %25 = vector.shape_cast %24 : vector<128xf32> to vector<128x1xf32>
    %26 = arith.addf %20, %25 : vector<128x1xf32>
    %c0_12 = arith.constant 0 : index
    %c0_13 = arith.constant 0 : index
    %27 = vector.load %arg6[%c0_12, %c0_13] : memref<128x1xf32, #tpu.memory_space<vmem>>, vector<128x1xf32>
    tpu.vector_store %arg6[%c0_12, %c0_13], %26 {strides = array<i32>} : memref<128x1xf32, #tpu.memory_space<vmem>>, vector<128x1xf32>,
    %c0_14 = arith.constant 0 : index
    %c0_15 = arith.constant 0 : index
    %28 = vector.load %arg5[%c0_14, %c0_15] : memref<128x1xf32, #tpu.memory_space<vmem>>, vector<128x1xf32>
    tpu.vector_store %arg5[%c0_14, %c0_15], %16 {strides = array<i32>} : memref<128x1xf32, #tpu.memory_space<vmem>>, vector<128x1xf32>,
    %c128_i32_16 = arith.constant 128 : i32
    %29 = arith.addi %12, %c128_i32_16 : i32
    %30 = arith.cmpi slt, %11, %29 : i32
    %c128_i32_17 = arith.constant 128 : i32
    %31 = arith.addi %11, %c128_i32_17 : i32
    %32 = arith.cmpi slt, %12, %31 : i32
    %33 = arith.andi %30, %32 : i1
    %34 = arith.extui %33 : i1 to i32
    %c0_i32_18 = arith.constant 0 : i32
    %35 = arith.cmpi ne, %34, %c0_i32_18 : i32
    scf.if %35 {
      %39 = tpu.iota {dimensions = array<i32: 0>} : vector<128x128xi32>
      %40 = vector.broadcast %11 : i32 to vector<128x128xi32>
      %41 = arith.addi %39, %40 : vector<128x128xi32>
      %42 = tpu.iota {dimensions = array<i32: 1>} : vector<128x128xi32>
      %43 = vector.broadcast %12 : i32 to vector<128x128xi32>
      %44 = arith.addi %42, %43 : vector<128x128xi32>
      %c0_20 = arith.constant 0 : index
      %c0_21 = arith.constant 0 : index
      %45 = vector.load %arg7[%c0_20, %c0_21] : memref<128x1xf32, #tpu.memory_space<vmem>>, vector<128x1xf32>
      %46 = arith.cmpi eq, %41, %44 : vector<128x128xi32>
      %cst_22 = arith.constant 0.000000e+00 : f32
      %47 = vector.broadcast %cst_22 : f32 to vector<128x128xf32>
      %48 = arith.select %46, %10, %47 : vector<128x128xi1>, vector<128x128xf32>
      %cst_23 = arith.constant dense<0.000000e+00> : vector<128xf32>
      %49 = vector.multi_reduction <add>, %48, %cst_23 [1] : vector<128x128xf32> to vector<128xf32>
      %50 = vector.shape_cast %49 : vector<128xf32> to vector<128x1xf32>
      %51 = arith.addf %45, %50 : vector<128x1xf32>
      %c0_24 = arith.constant 0 : index
      %c0_25 = arith.constant 0 : index
      %52 = vector.load %arg7[%c0_24, %c0_25] : memref<128x1xf32, #tpu.memory_space<vmem>>, vector<128x1xf32>
      tpu.vector_store %arg7[%c0_24, %c0_25], %51 {strides = array<i32>} : memref<128x1xf32, #tpu.memory_space<vmem>>, vector<128x1xf32>,
    } else {
    }
    %c1_i32 = arith.constant 1 : i32
    %36 = arith.cmpi eq, %arg1, %c1_i32 : i32
    %37 = arith.extui %36 : i1 to i32
    %c0_i32_19 = arith.constant 0 : i32
    %38 = arith.cmpi ne, %37, %c0_i32_19 : i32
    scf.if %38 {
      %c0_20 = arith.constant 0 : index
      %c0_21 = arith.constant 0 : index
      %39 = vector.load %arg5[%c0_20, %c0_21] : memref<128x1xf32, #tpu.memory_space<vmem>>, vector<128x1xf32>
      %c0_22 = arith.constant 0 : index
      %c0_23 = arith.constant 0 : index
      %40 = vector.load %arg6[%c0_22, %c0_23] : memref<128x1xf32, #tpu.memory_space<vmem>>, vector<128x1xf32>
      %41 = math.log %40 : vector<128x1xf32>
      %42 = arith.addf %39, %41 : vector<128x1xf32>
      %c0_24 = arith.constant 0 : index
      %c0_25 = arith.constant 0 : index
      %43 = vector.load %arg7[%c0_24, %c0_25] : memref<128x1xf32, #tpu.memory_space<vmem>>, vector<128x1xf32>
      %44 = arith.subf %42, %43 : vector<128x1xf32>
      %c0_26 = arith.constant 0 : index
      %c0_27 = arith.constant 0 : index
      %45 = vector.load %arg4[%c0_26, %c0_27] : memref<128x1xf32, #tpu.memory_space<vmem>>, vector<128x1xf32>
      tpu.vector_store %arg4[%c0_26, %c0_27], %44 {strides = array<i32>} : memref<128x1xf32, #tpu.memory_space<vmem>>, vector<128x1xf32>,
    } else {
    }
    return
  }
  func.func @transform_0(%arg0: i32, %arg1: i32) -> (i32, i32) {
    %c0_i32 = arith.constant 0 : i32
    %c0_i32_0 = arith.constant 0 : i32
    return %arg0, %c0_i32 : i32, i32
  }
  func.func @transform_1(%arg0: i32, %arg1: i32) -> (i32, i32) {
    %c0_i32 = arith.constant 0 : i32
    %c0_i32_0 = arith.constant 0 : i32
    %c0_i32_1 = arith.constant 0 : i32
    return %c0_i32, %c0_i32_0 : i32, i32
  }
  func.func @transform_2(%arg0: i32, %arg1: i32) -> (i32, i32) {
    %c0_i32 = arith.constant 0 : i32
    %c0_i32_0 = arith.constant 0 : i32
    return %arg0, %c0_i32 : i32, i32
  }
}

</mosaic_0001>

<llo_original>
// kernel: tpu_custom_call.1
$region0: #{tpu_custom_call.1}
  #allocation0 [shape = 'u32[]', space=smem, size = 0x4, offset = 0x4, fixed_abs, tag = 'smem constant byte address 0x4 - core index']
  #allocation1 [shape = 'u32[144,128]{1,0:T(1,128)}', space=vmem, size = 0x12000, scoped, tag = 'internal scratch']
  #allocation2 [shape = 'f32[128,1]{1,0:T(8,128)}', space=vmem, size = 0x10000, scoped, tag = 'scratch operand']
  #allocation3 [shape = 'f32[128,1]{1,0:T(8,128)}', space=vmem, size = 0x10000, scoped, tag = 'scratch operand']
  #allocation4 [shape = 'f32[128,1]{1,0:T(8,128)}', space=vmem, size = 0x10000, scoped, tag = 'scratch operand']
  %s0 = inlined_call_operand.vmem [shape: f32[256,32], index: 0, kind: input, shape index: {}]
  %s1 = inlined_call_operand.vmem [shape: f32[32,256], index: 1, kind: input, shape index: {}]
  %s2 = inlined_call_operand.vmem [shape: f32[256,1], index: 2, kind: output, shape index: {}]
  %s3 = sld [smem:[#allocation0]]
  $region53: #{tpu_custom_call.1} parent=0
    _
  %s5 = ssub.s32 1, %s3
  %s6 = scalar_select 0, %s5, %s3
  loop: start=0, step=1, limit=6
  $region2: #{tpu_custom_call.1} parent=0 // loop_pre_header
    _
  $region3: #{tpu_custom_call.1} parent=0 // loop_header
    %s8 = sphi 0, %s12
    %p9 = scmp.ge.s32.totalorder %s8, 6
    %s15 = sphi 0, %s27
    %s16 = sphi 0, %s23
    %s17 = sphi 0, %s15
    %s18 = sphi 0, %s16
    %s19 = sphi 0, %s17
    %s20 = sphi 0, %s18
    %s30 = sphi 0, %s32
    %s33 = sphi 0, %s30
    %s34 = sphi 0, %s33
    %s50 = sphi 0, %s34
    %s54 = sphi 0, %s54
    %s56 = sphi 0, %s54
    %s57 = sphi 0, %s56
    %s71 = sphi 0, %s57
    %s77 = sphi 0, %s79
    %s80 = sphi 0, %s77
    %s81 = sphi 0, %s80
    %s97 = sphi 0, %s81
  $region4: #{tpu_custom_call.1} parent=0 // loop_header_branch
    %11 = sbr.rel (%p9) target = $region8
  $region5: #{tpu_custom_call.1} parent=0 // loop_body
    %s13 = ssub.s32 %s8, 1
    %s14 = ssub.s32 %s8, 2
    %s21 = sadd.s32 1, %s16
    %p22 = scmp.ge.s32.totalorder %s21, 2
    %s23 = scalar_select %p22, 0, %s21
    %s24 = sadd.s32 1, %s15
    %s25 = scalar_select %p22, %s24, %s15
    %p26 = scmp.ge.s32.totalorder %s25, 2
    %s27 = scalar_select %p26, 0, %s25
    %s28 = ssub.s32 %s15, %s27
    %p29 = scmp.eq.s32.totalorder %s28, 0
    %s31 = sadd.s32 %s30, 1
    %s32 = scalar_select %p29, %s30, %s31
    %p35 = pneg %p29
    %p36 = scmp.eq.s32.totalorder %s8, 3
    %p37 = por %p35, %p36
    %p38 = scmp.ne.s32.totalorder %s30, %s33
    %p39 = scmp.eq.s32.totalorder %s8, 0
    %p40 = por %p38, %p39
    %p41 = scmp.ne.s32.totalorder %s30, %s33
    %p42 = scmp.eq.s32.totalorder %s13, 3
    %p43 = por %p41, %p42
    %p44 = scmp.ne.s32.totalorder %s33, %s34
    %p45 = scmp.eq.s32.totalorder %s13, 0
    %p46 = por %p44, %p45
    %p47 = scmp.ne.s32.totalorder %s33, %s34
    %p48 = scmp.eq.s32.totalorder %s14, 3
    %p49 = por %p47, %p48
    %p51 = scmp.ne.s32.totalorder %s34, %s50
    %p52 = scmp.eq.s32.totalorder %s14, 0
    %p53 = por %p51, %p52
    %s55 = sadd.s32 %s54, 1
    %p58 = scmp.eq.s32.totalorder %s8, 3
    %p59 = scmp.ne.s32.totalorder %s54, %s56
    %p60 = scmp.eq.s32.totalorder %s8, 0
    %p61 = por %p59, %p60
    %p62 = scmp.ne.s32.totalorder %s54, %s56
    %p63 = scmp.eq.s32.totalorder %s13, 3
    %p64 = por %p62, %p63
    %p65 = scmp.ne.s32.totalorder %s56, %s57
    %p66 = scmp.eq.s32.totalorder %s13, 0
    %p67 = por %p65, %p66
    %p68 = scmp.ne.s32.totalorder %s56, %s57
    %p69 = scmp.eq.s32.totalorder %s14, 3
    %p70 = por %p68, %p69
    %p72 = scmp.ne.s32.totalorder %s57, %s71
    %p73 = scmp.eq.s32.totalorder %s14, 0
    %p74 = por %p72, %p73
    %s75 = ssub.s32 %s15, %s27
    %p76 = scmp.eq.s32.totalorder %s75, 0
    %s78 = sadd.s32 %s77, 1
    %s79 = scalar_select %p76, %s77, %s78
    %p82 = pneg %p76
    %p83 = scmp.eq.s32.totalorder %s8, 3
    %p84 = por %p82, %p83
    %p85 = scmp.ne.s32.totalorder %s77, %s80
    %p86 = scmp.eq.s32.totalorder %s8, 0
    %p87 = por %p85, %p86
    %p88 = scmp.ne.s32.totalorder %s77, %s80
    %p89 = scmp.eq.s32.totalorder %s13, 3
    %p90 = por %p88, %p89
    %p91 = scmp.ne.s32.totalorder %s80, %s81
    %p92 = scmp.eq.s32.totalorder %s13, 0
    %p93 = por %p91, %p92
    %p94 = scmp.ne.s32.totalorder %s80, %s81
    %p95 = scmp.eq.s32.totalorder %s14, 3
    %p96 = por %p94, %p95
    %p98 = scmp.ne.s32.totalorder %s81, %s97
    %p99 = scmp.eq.s32.totalorder %s14, 0
    %p100 = por %p98, %p99
    %p101 = scmp.le.s32.totalorder 1, %s8
    %p102 = scmp.lt.s32.totalorder %s8, 5
    %p103 = pnand %p101, %p102
    %p104 = pneg %p103
    // Predicated region
    $region9: #{tpu_custom_call.1} parent=5 // pred_check
      _
    $region10: #{tpu_custom_call.1} parent=5 // pred_check_branch
      %106 = sbr.rel (%p103) target = $region12
    $region11: #{tpu_custom_call.1} parent=5 // pred_region
      %s107 = ssub.s32 %s8, 1
      // Predicated region
      $region13: #{tpu_custom_call.1} parent=11 // pred_check
        %p108 = pneg %p67
      $region14: #{tpu_custom_call.1} parent=11 // pred_check_branch
        %110 = sbr.rel (%p108) target = $region16
      $region15: #{tpu_custom_call.1} parent=11 // pred_region
        _
      $region16: #{tpu_custom_call.1} parent=11 // pred_fallthru
        _
    $region12: #{tpu_custom_call.1} parent=5 // pred_fallthru
      _
    %p111 = scmp.lt.s32.totalorder %s8, 4
    // Predicated region
    $region17: #{tpu_custom_call.1} parent=5 // pred_check
      %p112 = pneg %p111
    $region18: #{tpu_custom_call.1} parent=5 // pred_check_branch
      %114 = sbr.rel (%p112) target = $region20
    $region19: #{tpu_custom_call.1} parent=5 // pred_region
      // Predicated region
      $region21: #{tpu_custom_call.1} parent=19 // pred_check
        %p115 = pneg %p40
      $region22: #{tpu_custom_call.1} parent=19 // pred_check_branch
        %117 = sbr.rel (%p115) target = $region24
      $region23: #{tpu_custom_call.1} parent=19 // pred_region
        %s118 = smul.u32 16, %s15
        %p119 = scmp.lt.s32.totalorder %s118, 31
        %s120 = scalar_select %p119, %s118, 31
        %s121 = smul.addr %s120, 8
        %s122 = scalar_lea.vmem %s0, %s121
        %s123 = smul.u32 16, %s15
      $region24: #{tpu_custom_call.1} parent=19 // pred_fallthru
        _
    $region20: #{tpu_custom_call.1} parent=5 // pred_fallthru
      _
    %p124 = scmp.le.s32.totalorder 1, %s8
    %p125 = scmp.lt.s32.totalorder %s8, 5
    %p126 = pnand %p124, %p125
    %p127 = pneg %p126
    // Predicated region
    $region25: #{tpu_custom_call.1} parent=5 // pred_check
      _
    $region26: #{tpu_custom_call.1} parent=5 // pred_check_branch
      %129 = sbr.rel (%p126) target = $region28
    $region27: #{tpu_custom_call.1} parent=5 // pred_region
      %s130 = ssub.s32 %s8, 1
      %s131 = smul.u32 16, %s17
      %p132 = scmp.lt.s32.totalorder %s131, 31
      %s133 = scalar_select %p132, %s131, 31
      %s134 = smul.addr %s133, 8
      %s135 = scalar_lea.vmem %s0, %s134
      %p136 = pneg %p46
      %p137 = pneg %p43
      %p138 = pneg %p67
      %p139 = pneg %p64
      %p140 = pneg %p93
      %p141 = pneg %p90
      %s142 = smul.u32 16, %s17
      %p143 = scmp.lt.s32.totalorder %s142, 31
      %s144 = scalar_select %p143, %s142, 31
      %s145 = smul.addr %s144, 8
      %s146 = scalar_lea.vmem %s2, %s145
      %s147 = smul.u32 16, %s17
      %p148 = scmp.lt.s32.totalorder %s147, 31
      %s149 = scalar_select %p148, %s147, 31
      %s150 = smul.addr %s149, 8
      %s151 = scalar_lea.vmem %s0, %s150
      %s152 = smul.u32 16, %s17
      %s153 = smul.u32 16, %s17
      %p154 = scmp.lt.s32.totalorder %s153, 31
      %s155 = scalar_select %p154, %s153, 31
      %s156 = smul.addr %s155, 8
      %s157 = scalar_lea.vmem %s2, %s156
      %s158 = smul.u32 16, %s17
      %p159 = scmp.eq.s32.totalorder %s18, 0
      // Predicated region
      $region29: #{tpu_custom_call.1} parent=27 // pred_check
        %p160 = pneg %p159
      $region30: #{tpu_custom_call.1} parent=27 // pred_check_branch
        %162 = sbr.rel (%p160) target = $region32
      $region31: #{tpu_custom_call.1} parent=27 // pred_region
        %vm163 = vcmask 7168
        %164 = vst.msk [vmem:[#allocation2] sm:$0xff] %vm163, -inf
        %165 = vst.msk [vmem:[#allocation2 + $0x8] sm:$0xff] %vm163, -inf
        %166 = vst.msk [vmem:[#allocation2 + $0x10] sm:$0xff] %vm163, -inf
        %167 = vst.msk [vmem:[#allocation2 + $0x18] sm:$0xff] %vm163, -inf
        %168 = vst.msk [vmem:[#allocation2 + $0x20] sm:$0xff] %vm163, -inf
        %169 = vst.msk [vmem:[#allocation2 + $0x28] sm:$0xff] %vm163, -inf
        %170 = vst.msk [vmem:[#allocation2 + $0x30] sm:$0xff] %vm163, -inf
        %171 = vst.msk [vmem:[#allocation2 + $0x38] sm:$0xff] %vm163, -inf
        %172 = vst.msk [vmem:[#allocation2 + $0x40] sm:$0xff] %vm163, -inf
        %173 = vst.msk [vmem:[#allocation2 + $0x48] sm:$0xff] %vm163, -inf
        %174 = vst.msk [vmem:[#allocation2 + $0x50] sm:$0xff] %vm163, -inf
        %175 = vst.msk [vmem:[#allocation2 + $0x58] sm:$0xff] %vm163, -inf
        %176 = vst.msk [vmem:[#allocation2 + $0x60] sm:$0xff] %vm163, -inf
        %177 = vst.msk [vmem:[#allocation2 + $0x68] sm:$0xff] %vm163, -inf
        %178 = vst.msk [vmem:[#allocation2 + $0x70] sm:$0xff] %vm163, -inf
        %179 = vst.msk [vmem:[#allocation2 + $0x78] sm:$0xff] %vm163, -inf
        %180 = vst.msk [vmem:[#allocation3] sm:$0xff] %vm163, 0.0
        %181 = vst.msk [vmem:[#allocation3 + $0x8] sm:$0xff] %vm163, 0.0
        %182 = vst.msk [vmem:[#allocation3 + $0x10] sm:$0xff] %vm163, 0.0
        %183 = vst.msk [vmem:[#allocation3 + $0x18] sm:$0xff] %vm163, 0.0
        %184 = vst.msk [vmem:[#allocation3 + $0x20] sm:$0xff] %vm163, 0.0
        %185 = vst.msk [vmem:[#allocation3 + $0x28] sm:$0xff] %vm163, 0.0
        %186 = vst.msk [vmem:[#allocation3 + $0x30] sm:$0xff] %vm163, 0.0
        %187 = vst.msk [vmem:[#allocation3 + $0x38] sm:$0xff] %vm163, 0.0
        %188 = vst.msk [vmem:[#allocation3 + $0x40] sm:$0xff] %vm163, 0.0
        %189 = vst.msk [vmem:[#allocation3 + $0x48] sm:$0xff] %vm163, 0.0
        %190 = vst.msk [vmem:[#allocation3 + $0x50] sm:$0xff] %vm163, 0.0
        %191 = vst.msk [vmem:[#allocation3 + $0x58] sm:$0xff] %vm163, 0.0
        %192 = vst.msk [vmem:[#allocation3 + $0x60] sm:$0xff] %vm163, 0.0
        %193 = vst.msk [vmem:[#allocation3 + $0x68] sm:$0xff] %vm163, 0.0
        %194 = vst.msk [vmem:[#allocation3 + $0x70] sm:$0xff] %vm163, 0.0
        %195 = vst.msk [vmem:[#allocation3 + $0x78] sm:$0xff] %vm163, 0.0
        %196 = vst.msk [vmem:[#allocation4] sm:$0xff] %vm163, 0.0
        %197 = vst.msk [vmem:[#allocation4 + $0x8] sm:$0xff] %vm163, 0.0
        %198 = vst.msk [vmem:[#allocation4 + $0x10] sm:$0xff] %vm163, 0.0
        %199 = vst.msk [vmem:[#allocation4 + $0x18] sm:$0xff] %vm163, 0.0
        %200 = vst.msk [vmem:[#allocation4 + $0x20] sm:$0xff] %vm163, 0.0
        %201 = vst.msk [vmem:[#allocation4 + $0x28] sm:$0xff] %vm163, 0.0
        %202 = vst.msk [vmem:[#allocation4 + $0x30] sm:$0xff] %vm163, 0.0
        %203 = vst.msk [vmem:[#allocation4 + $0x38] sm:$0xff] %vm163, 0.0
        %204 = vst.msk [vmem:[#allocation4 + $0x40] sm:$0xff] %vm163, 0.0
        %205 = vst.msk [vmem:[#allocation4 + $0x48] sm:$0xff] %vm163, 0.0
        %206 = vst.msk [vmem:[#allocation4 + $0x50] sm:$0xff] %vm163, 0.0
        %207 = vst.msk [vmem:[#allocation4 + $0x58] sm:$0xff] %vm163, 0.0
        %208 = vst.msk [vmem:[#allocation4 + $0x60] sm:$0xff] %vm163, 0.0
        %209 = vst.msk [vmem:[#allocation4 + $0x68] sm:$0xff] %vm163, 0.0
        %210 = vst.msk [vmem:[#allocation4 + $0x70] sm:$0xff] %vm163, 0.0
        %211 = vst.msk [vmem:[#allocation4 + $0x78] sm:$0xff] %vm163, 0.0
      $region32: #{tpu_custom_call.1} parent=27 // pred_fallthru
        _
      %s212 = smul.u32 %s18, 128
      %s213 = sshra.s32 %s212, 7
      %s214 = sand.u32 %s212, 127
      %s215 = smul.addr %s213, 8
      %s216 = scalar_lea.vmem %s1, %s215
      %v217 = vld [vmem:[%s216] sm:$0xff]
      %v218 = vld [vmem:[%s216 + $0x10] sm:$0xff]
      %v219 = vld [vmem:[%s216 + $0x20] sm:$0xff]
      %v220 = vld [vmem:[%s216 + $0x30] sm:$0xff]
      %v221 = vld [vmem:[%s151] sm:$0xff]
      %v222 = vld [vmem:[%s151 + $0x8] sm:$0xff]
      %v223 = vld [vmem:[%s151 + $0x10] sm:$0xff]
      %v224 = vld [vmem:[%s151 + $0x18] sm:$0xff]
      %v225 = vld [vmem:[%s151 + $0x20] sm:$0xff]
      %v226 = vld [vmem:[%s151 + $0x28] sm:$0xff]
      %v227 = vld [vmem:[%s151 + $0x30] sm:$0xff]
      %v228 = vld [vmem:[%s151 + $0x38] sm:$0xff]
      %v229 = vld [vmem:[%s151 + $0x40] sm:$0xff]
      %v230 = vld [vmem:[%s151 + $0x48] sm:$0xff]
      %v231 = vld [vmem:[%s151 + $0x50] sm:$0xff]
      %v232 = vld [vmem:[%s151 + $0x58] sm:$0xff]
      %v233 = vld [vmem:[%s151 + $0x60] sm:$0xff]
      %v234 = vld [vmem:[%s151 + $0x68] sm:$0xff]
      %v235 = vld [vmem:[%s151 + $0x70] sm:$0xff]
      %v236 = vld [vmem:[%s151 + $0x78] sm:$0xff]
      %vm237 = vcmask 261120
      %v239 = vsel %vm237, %v221, 0
      %v242 = vsel %vm237, %v222, 0
      %v245 = vsel %vm237, %v223, 0
      %v248 = vsel %vm237, %v224, 0
      %v251 = vsel %vm237, %v225, 0
      %v254 = vsel %vm237, %v226, 0
      %v257 = vsel %vm237, %v227, 0
      %v260 = vsel %vm237, %v228, 0
      %v263 = vsel %vm237, %v229, 0
      %v266 = vsel %vm237, %v230, 0
      %v269 = vsel %vm237, %v231, 0
      %v272 = vsel %vm237, %v232, 0
      %v275 = vsel %vm237, %v233, 0
      %v278 = vsel %vm237, %v234, 0
      %v281 = vsel %vm237, %v235, 0
      %v284 = vsel %vm237, %v236, 0
      %286 = vmatprep.subr.mxu0 0.0
      %287 = vmatpush1.msra.mxu0 %v217
      %288 = vmatprep.subr.mxu0 0.0
      %289 = vmatpush1.msra.mxu0 %v218
      %290 = vmatprep.subr.mxu0 0.0
      %291 = vmatpush1.msra.mxu0 %v219
      %292 = vmatprep.subr.mxu0 0.0
      %293 = vmatpush1.msra.mxu0 %v220
      %294 = vmatprep.subr.mxu0 0.0
      %295 = vmatpush1.msra.mxu0 0.0
      %296 = vmatprep.subr.mxu0 0.0
      %297 = vmatpush1.msra.mxu0 0.0
      %298 = vmatprep.subr.mxu0 0.0
      %299 = vmatpush1.msra.mxu0 0.0
      %300 = vmatprep.subr.mxu0 0.0
      %301 = vmatpush1.msra.mxu0 0.0
      %302 = vmatprep.subr.mxu0 0.0
      %303 = vmatpush1.msra.mxu0 0.0
      %304 = vmatprep.subr.mxu0 0.0
      %305 = vmatpush1.msra.mxu0 0.0
      %306 = vmatprep.subr.mxu0 0.0
      %307 = vmatpush1.msra.mxu0 0.0
      %308 = vmatprep.subr.mxu0 0.0
      %309 = vmatpush1.msra.mxu0 0.0
      %310 = vmatprep.subr.mxu0 0.0
      %311 = vmatpush1.msra.mxu0 0.0
      %312 = vmatprep.subr.mxu0 0.0
      %313 = vmatpush1.msra.mxu0 0.0
      %314 = vmatprep.subr.mxu0 0.0
      %315 = vmatpush1.msra.mxu0 0.0
      %316 = vmatprep.subr.mxu0 0.0
      %317 = vmatpush1.msra.mxu0 0.0
      %318 = vmatprep.subr.mxu0 0.0
      %319 = vmatpush1.msra.mxu0 0.0
      %320 = vmatprep.subr.mxu0 0.0
      %321 = vmatpush1.msra.mxu0 0.0
      %322 = vmatprep.subr.mxu0 0.0
      %323 = vmatpush1.msra.mxu0 0.0
      %324 = vmatprep.subr.mxu0 0.0
      %325 = vmatpush1.msra.mxu0 0.0
      %326 = vmatprep.subr.mxu0 0.0
      %327 = vmatpush1.msra.mxu0 0.0
      %328 = vmatprep.subr.mxu0 0.0
      %329 = vmatpush1.msra.mxu0 0.0
      %330 = vmatprep.subr.mxu0 0.0
      %331 = vmatpush1.msra.mxu0 0.0
      %332 = vmatprep.subr.mxu0 0.0
      %333 = vmatpush1.msra.mxu0 0.0
      %334 = vmatprep.subr.mxu0 0.0
      %335 = vmatpush1.msra.mxu0 0.0
      %336 = vmatprep.subr.mxu0 0.0
      %337 = vmatpush1.msra.mxu0 0.0
      %338 = vmatprep.subr.mxu0 0.0
      %339 = vmatpush1.msra.mxu0 0.0
      %340 = vmatprep.subr.mxu0 0.0
      %341 = vmatpush1.msra.mxu0 0.0
      %342 = vmatprep.subr.mxu0 0.0
      %343 = vmatpush1.msra.mxu0 0.0
      %344 = vmatprep.subr.mxu0 0.0
      %345 = vmatpush1.msra.mxu0 0.0
      %346 = vmatprep.subr.mxu0 0.0
      %347 = vmatpush1.msra.mxu0 0.0
      %348 = vmatprep.subr.mxu0 0.0
      %349 = vmatpush1.msra.mxu0 0.0
      %350 = vmatprep.mubr.f32.mxu0 0.0
      %351 = vmatmul.mubr.f32.gmra.mrb[0].mxu0 %v239
      %v352 = vpop.f32.mrb[0].mxu0
      %v353 = vadd.f32 0.0, %v352
      %v354 = vpop.f32.mrb[0].mxu0
      %355 = vmatprep.mubr.f32.mxu0 0.0
      %356 = vmatmul.mubr.f32.gmra.mrb[0].mxu0 %v242
      %v357 = vpop.f32.mrb[0].mxu0
      %v358 = vadd.f32 0.0, %v357
      %v359 = vpop.f32.mrb[0].mxu0
      %360 = vmatprep.mubr.f32.mxu0 0.0
      %361 = vmatmul.mubr.f32.gmra.mrb[0].mxu0 %v245
      %v362 = vpop.f32.mrb[0].mxu0
      %v363 = vadd.f32 0.0, %v362
      %v364 = vpop.f32.mrb[0].mxu0
      %365 = vmatprep.mubr.f32.mxu0 0.0
      %366 = vmatmul.mubr.f32.gmra.mrb[0].mxu0 %v248
      %v367 = vpop.f32.mrb[0].mxu0
      %v368 = vadd.f32 0.0, %v367
      %v369 = vpop.f32.mrb[0].mxu0
      %370 = vmatprep.mubr.f32.mxu0 0.0
      %371 = vmatmul.mubr.f32.gmra.mrb[0].mxu0 %v251
      %v372 = vpop.f32.mrb[0].mxu0
      %v373 = vadd.f32 0.0, %v372
      %v374 = vpop.f32.mrb[0].mxu0
      %375 = vmatprep.mubr.f32.mxu0 0.0
      %376 = vmatmul.mubr.f32.gmra.mrb[0].mxu0 %v254
      %v377 = vpop.f32.mrb[0].mxu0
      %v378 = vadd.f32 0.0, %v377
      %v379 = vpop.f32.mrb[0].mxu0
      %380 = vmatprep.mubr.f32.mxu0 0.0
      %381 = vmatmul.mubr.f32.gmra.mrb[0].mxu0 %v257
      %v382 = vpop.f32.mrb[0].mxu0
      %v383 = vadd.f32 0.0, %v382
      %v384 = vpop.f32.mrb[0].mxu0
      %385 = vmatprep.mubr.f32.mxu0 0.0
      %386 = vmatmul.mubr.f32.gmra.mrb[0].mxu0 %v260
      %v387 = vpop.f32.mrb[0].mxu0
      %v388 = vadd.f32 0.0, %v387
      %v389 = vpop.f32.mrb[0].mxu0
      %390 = vmatprep.mubr.f32.mxu0 0.0
      %391 = vmatmul.mubr.f32.gmra.mrb[0].mxu0 %v263
      %v392 = vpop.f32.mrb[0].mxu0
      %v393 = vadd.f32 0.0, %v392
      %v394 = vpop.f32.mrb[0].mxu0
      %395 = vmatprep.mubr.f32.mxu0 0.0
      %396 = vmatmul.mubr.f32.gmra.mrb[0].mxu0 %v266
      %v397 = vpop.f32.mrb[0].mxu0
      %v398 = vadd.f32 0.0, %v397
      %v399 = vpop.f32.mrb[0].mxu0
      %400 = vmatprep.mubr.f32.mxu0 0.0
      %401 = vmatmul.mubr.f32.gmra.mrb[0].mxu0 %v269
      %v402 = vpop.f32.mrb[0].mxu0
      %v403 = vadd.f32 0.0, %v402
      %v404 = vpop.f32.mrb[0].mxu0
      %405 = vmatprep.mubr.f32.mxu0 0.0
      %406 = vmatmul.mubr.f32.gmra.mrb[0].mxu0 %v272
      %v407 = vpop.f32.mrb[0].mxu0
      %v408 = vadd.f32 0.0, %v407
      %v409 = vpop.f32.mrb[0].mxu0
      %410 = vmatprep.mubr.f32.mxu0 0.0
      %411 = vmatmul.mubr.f32.gmra.mrb[0].mxu0 %v275
      %v412 = vpop.f32.mrb[0].mxu0
      %v413 = vadd.f32 0.0, %v412
      %v414 = vpop.f32.mrb[0].mxu0
      %415 = vmatprep.mubr.f32.mxu0 0.0
      %416 = vmatmul.mubr.f32.gmra.mrb[0].mxu0 %v278
      %v417 = vpop.f32.mrb[0].mxu0
      %v418 = vadd.f32 0.0, %v417
      %v419 = vpop.f32.mrb[0].mxu0
      %420 = vmatprep.mubr.f32.mxu0 0.0
      %421 = vmatmul.mubr.f32.gmra.mrb[0].mxu0 %v281
      %v422 = vpop.f32.mrb[0].mxu0
      %v423 = vadd.f32 0.0, %v422
      %v424 = vpop.f32.mrb[0].mxu0
      %425 = vmatprep.mubr.f32.mxu0 0.0
      %426 = vmatmul.mubr.f32.gmra.mrb[0].mxu0 %v284
      %v427 = vpop.f32.mrb[0].mxu0
      %v428 = vadd.f32 0.0, %v427
      %v429 = vpop.f32.mrb[0].mxu0
      %430 = vdwg.mxu0
      %v431 = vmul.f32 %v353, 14.285714
      %v432 = vmul.f32 %v358, 14.285714
      %v433 = vmul.f32 %v363, 14.285714
      %v434 = vmul.f32 %v368, 14.285714
      %v435 = vmul.f32 %v373, 14.285714
      %v436 = vmul.f32 %v378, 14.285714
      %v437 = vmul.f32 %v383, 14.285714
      %v438 = vmul.f32 %v388, 14.285714
      %v439 = vmul.f32 %v393, 14.285714
      %v440 = vmul.f32 %v398, 14.285714
      %v441 = vmul.f32 %v403, 14.285714
      %v442 = vmul.f32 %v408, 14.285714
      %v443 = vmul.f32 %v413, 14.285714
      %v444 = vmul.f32 %v418, 14.285714
      %v445 = vmul.f32 %v423, 14.285714
      %v446 = vmul.f32 %v428, 14.285714
      %s447 = smul.u32 %s17, 128
      %v448 = vld [vmem:[#allocation2] sm:$0xff]
      %v449 = vld [vmem:[#allocation2 + $0x8] sm:$0xff]
      %v450 = vld [vmem:[#allocation2 + $0x10] sm:$0xff]
      %v451 = vld [vmem:[#allocation2 + $0x18] sm:$0xff]
      %v452 = vld [vmem:[#allocation2 + $0x20] sm:$0xff]
      %v453 = vld [vmem:[#allocation2 + $0x28] sm:$0xff]
      %v454 = vld [vmem:[#allocation2 + $0x30] sm:$0xff]
      %v455 = vld [vmem:[#allocation2 + $0x38] sm:$0xff]
      %v456 = vld [vmem:[#allocation2 + $0x40] sm:$0xff]
      %v457 = vld [vmem:[#allocation2 + $0x48] sm:$0xff]
      %v458 = vld [vmem:[#allocation2 + $0x50] sm:$0xff]
      %v459 = vld [vmem:[#allocation2 + $0x58] sm:$0xff]
      %v460 = vld [vmem:[#allocation2 + $0x60] sm:$0xff]
      %v461 = vld [vmem:[#allocation2 + $0x68] sm:$0xff]
      %v462 = vld [vmem:[#allocation2 + $0x70] sm:$0xff]
      %v463 = vld [vmem:[#allocation2 + $0x78] sm:$0xff]
      %464 = vmax.xlane.f32.xlu0 %v431
      %v465 = vpop.xlane.xlu0 %464
      %466 = vmax.xlane.f32.xlu0 %v432
      %v467 = vpop.xlane.xlu0 %466
      %468 = vmax.xlane.f32.xlu0 %v433
      %v469 = vpop.xlane.xlu0 %468
      %470 = vmax.xlane.f32.xlu0 %v434
      %v471 = vpop.xlane.xlu0 %470
      %472 = vmax.xlane.f32.xlu0 %v435
      %v473 = vpop.xlane.xlu0 %472
      %474 = vmax.xlane.f32.xlu0 %v436
      %v475 = vpop.xlane.xlu0 %474
      %476 = vmax.xlane.f32.xlu0 %v437
      %v477 = vpop.xlane.xlu0 %476
      %478 = vmax.xlane.f32.xlu0 %v438
      %v479 = vpop.xlane.xlu0 %478
      %480 = vmax.xlane.f32.xlu0 %v439
      %v481 = vpop.xlane.xlu0 %480
      %482 = vmax.xlane.f32.xlu0 %v440
      %v483 = vpop.xlane.xlu0 %482
      %484 = vmax.xlane.f32.xlu0 %v441
      %v485 = vpop.xlane.xlu0 %484
      %486 = vmax.xlane.f32.xlu0 %v442
      %v487 = vpop.xlane.xlu0 %486
      %488 = vmax.xlane.f32.xlu0 %v443
      %v489 = vpop.xlane.xlu0 %488
      %490 = vmax.xlane.f32.xlu0 %v444
      %v491 = vpop.xlane.xlu0 %490
      %492 = vmax.xlane.f32.xlu0 %v445
      %v493 = vpop.xlane.xlu0 %492
      %494 = vmax.xlane.f32.xlu0 %v446
      %v495 = vpop.xlane.xlu0 %494
      %v496 = vmax.f32 %v448, %v465
      %v497 = vmax.f32 %v449, %v467
      %v498 = vmax.f32 %v450, %v469
      %v499 = vmax.f32 %v451, %v471
      %v500 = vmax.f32 %v452, %v473
      %v501 = vmax.f32 %v453, %v475
      %v502 = vmax.f32 %v454, %v477
      %v503 = vmax.f32 %v455, %v479
      %v504 = vmax.f32 %v456, %v481
      %v505 = vmax.f32 %v457, %v483
      %v506 = vmax.f32 %v458, %v485
      %v507 = vmax.f32 %v459, %v487
      %v508 = vmax.f32 %v460, %v489
      %v509 = vmax.f32 %v461, %v491
      %v510 = vmax.f32 %v462, %v493
      %v511 = vmax.f32 %v463, %v495
      %v512 = vsub.f32 %v448, %v496
      %v513 = vsub.f32 %v449, %v497
      %v514 = vsub.f32 %v450, %v498
      %v515 = vsub.f32 %v451, %v499
      %v516 = vsub.f32 %v452, %v500
      %v517 = vsub.f32 %v453, %v501
      %v518 = vsub.f32 %v454, %v502
      %v519 = vsub.f32 %v455, %v503
      %v520 = vsub.f32 %v456, %v504
      %v521 = vsub.f32 %v457, %v505
      %v522 = vsub.f32 %v458, %v506
      %v523 = vsub.f32 %v459, %v507
      %v524 = vsub.f32 %v460, %v508
      %v525 = vsub.f32 %v461, %v509
      %v526 = vsub.f32 %v462, %v510
      %v527 = vsub.f32 %v463, %v511
      %v528 = vmul.f32 %v512, 1.442695
      %v529 = vpow.pop %v528
      %v530 = vmul.f32 %v513, 1.442695
      %v531 = vpow.pop %v530
      %v532 = vmul.f32 %v514, 1.442695
      %v533 = vpow.pop %v532
      %v534 = vmul.f32 %v515, 1.442695
      %v535 = vpow.pop %v534
      %v536 = vmul.f32 %v516, 1.442695
      %v537 = vpow.pop %v536
      %v538 = vmul.f32 %v517, 1.442695
      %v539 = vpow.pop %v538
      %v540 = vmul.f32 %v518, 1.442695
      %v541 = vpow.pop %v540
      %v542 = vmul.f32 %v519, 1.442695
      %v543 = vpow.pop %v542
      %v544 = vmul.f32 %v520, 1.442695
      %v545 = vpow.pop %v544
      %v546 = vmul.f32 %v521, 1.442695
      %v547 = vpow.pop %v546
      %v548 = vmul.f32 %v522, 1.442695
      %v549 = vpow.pop %v548
      %v550 = vmul.f32 %v523, 1.442695
      %v551 = vpow.pop %v550
      %v552 = vmul.f32 %v524, 1.442695
      %v553 = vpow.pop %v552
      %v554 = vmul.f32 %v525, 1.442695
      %v555 = vpow.pop %v554
      %v556 = vmul.f32 %v526, 1.442695
      %v557 = vpow.pop %v556
      %v558 = vmul.f32 %v527, 1.442695
      %v559 = vpow.pop %v558
      %v560 = vld [vmem:[#allocation3] sm:$0xff]
      %v561 = vld [vmem:[#allocation3 + $0x8] sm:$0xff]
      %v562 = vld [vmem:[#allocation3 + $0x10] sm:$0xff]
      %v563 = vld [vmem:[#allocation3 + $0x18] sm:$0xff]
      %v564 = vld [vmem:[#allocation3 + $0x20] sm:$0xff]
      %v565 = vld [vmem:[#allocation3 + $0x28] sm:$0xff]
      %v566 = vld [vmem:[#allocation3 + $0x30] sm:$0xff]
      %v567 = vld [vmem:[#allocation3 + $0x38] sm:$0xff]
      %v568 = vld [vmem:[#allocation3 + $0x40] sm:$0xff]
      %v569 = vld [vmem:[#allocation3 + $0x48] sm:$0xff]
      %v570 = vld [vmem:[#allocation3 + $0x50] sm:$0xff]
      %v571 = vld [vmem:[#allocation3 + $0x58] sm:$0xff]
      %v572 = vld [vmem:[#allocation3 + $0x60] sm:$0xff]
      %v573 = vld [vmem:[#allocation3 + $0x68] sm:$0xff]
      %v574 = vld [vmem:[#allocation3 + $0x70] sm:$0xff]
      %v575 = vld [vmem:[#allocation3 + $0x78] sm:$0xff]
      %v576 = vmul.f32 %v529, %v560
      %v577 = vmul.f32 %v531, %v561
      %v578 = vmul.f32 %v533, %v562
      %v579 = vmul.f32 %v535, %v563
      %v580 = vmul.f32 %v537, %v564
      %v581 = vmul.f32 %v539, %v565
      %v582 = vmul.f32 %v541, %v566
      %v583 = vmul.f32 %v543, %v567
      %v584 = vmul.f32 %v545, %v568
      %v585 = vmul.f32 %v547, %v569
      %v586 = vmul.f32 %v549, %v570
      %v587 = vmul.f32 %v551, %v571
      %v588 = vmul.f32 %v553, %v572
      %v589 = vmul.f32 %v555, %v573
      %v590 = vmul.f32 %v557, %v574
      %v591 = vmul.f32 %v559, %v575
      %593 = vset.pattern.permute.xlu0 0
      %594 = vperm.xlu0 %593, %v496
      %v595 = vpop.permute.xlu0 %594
      %598 = vset.pattern.permute.xlu0 0
      %599 = vperm.xlu0 %598, %v497
      %v600 = vpop.permute.xlu0 %599
      %603 = vset.pattern.permute.xlu0 0
      %604 = vperm.xlu0 %603, %v498
      %v605 = vpop.permute.xlu0 %604
      %608 = vset.pattern.permute.xlu0 0
      %609 = vperm.xlu0 %608, %v499
      %v610 = vpop.permute.xlu0 %609
      %613 = vset.pattern.permute.xlu0 0
      %614 = vperm.xlu0 %613, %v500
      %v615 = vpop.permute.xlu0 %614
      %618 = vset.pattern.permute.xlu0 0
      %619 = vperm.xlu0 %618, %v501
      %v620 = vpop.permute.xlu0 %619
      %623 = vset.pattern.permute.xlu0 0
      %624 = vperm.xlu0 %623, %v502
      %v625 = vpop.permute.xlu0 %624
      %628 = vset.pattern.permute.xlu0 0
      %629 = vperm.xlu0 %628, %v503
      %v630 = vpop.permute.xlu0 %629
      %633 = vset.pattern.permute.xlu0 0
      %634 = vperm.xlu0 %633, %v504
      %v635 = vpop.permute.xlu0 %634
      %638 = vset.pattern.permute.xlu0 0
      %639 = vperm.xlu0 %638, %v505
      %v640 = vpop.permute.xlu0 %639
      %643 = vset.pattern.permute.xlu0 0
      %644 = vperm.xlu0 %643, %v506
      %v645 = vpop.permute.xlu0 %644
      %648 = vset.pattern.permute.xlu0 0
      %649 = vperm.xlu0 %648, %v507
      %v650 = vpop.permute.xlu0 %649
      %653 = vset.pattern.permute.xlu0 0
      %654 = vperm.xlu0 %653, %v508
      %v655 = vpop.permute.xlu0 %654
      %658 = vset.pattern.permute.xlu0 0
      %659 = vperm.xlu0 %658, %v509
      %v660 = vpop.permute.xlu0 %659
      %663 = vset.pattern.permute.xlu0 0
      %664 = vperm.xlu0 %663, %v510
      %v665 = vpop.permute.xlu0 %664
      %668 = vset.pattern.permute.xlu0 0
      %669 = vperm.xlu0 %668, %v511
      %v670 = vpop.permute.xlu0 %669
      %v672 = vsub.f32 %v431, %v595
      %v673 = vsub.f32 %v432, %v600
      %v674 = vsub.f32 %v433, %v605
      %v675 = vsub.f32 %v434, %v610
      %v676 = vsub.f32 %v435, %v615
      %v677 = vsub.f32 %v436, %v620
      %v678 = vsub.f32 %v437, %v625
      %v679 = vsub.f32 %v438, %v630
      %v680 = vsub.f32 %v439, %v635
      %v681 = vsub.f32 %v440, %v640
      %v682 = vsub.f32 %v441, %v645
      %v683 = vsub.f32 %v442, %v650
      %v684 = vsub.f32 %v443, %v655
      %v685 = vsub.f32 %v444, %v660
      %v686 = vsub.f32 %v445, %v665
      %v687 = vsub.f32 %v446, %v670
      %v688 = vmul.f32 %v672, 1.442695
      %v689 = vpow.pop %v688
      %v690 = vmul.f32 %v673, 1.442695
      %v691 = vpow.pop %v690
      %v692 = vmul.f32 %v674, 1.442695
      %v693 = vpow.pop %v692
      %v694 = vmul.f32 %v675, 1.442695
      %v695 = vpow.pop %v694
      %v696 = vmul.f32 %v676, 1.442695
      %v697 = vpow.pop %v696
      %v698 = vmul.f32 %v677, 1.442695
      %v699 = vpow.pop %v698
      %v700 = vmul.f32 %v678, 1.442695
      %v701 = vpow.pop %v700
      %v702 = vmul.f32 %v679, 1.442695
      %v703 = vpow.pop %v702
      %v704 = vmul.f32 %v680, 1.442695
      %v705 = vpow.pop %v704
      %v706 = vmul.f32 %v681, 1.442695
      %v707 = vpow.pop %v706
      %v708 = vmul.f32 %v682, 1.442695
      %v709 = vpow.pop %v708
      %v710 = vmul.f32 %v683, 1.442695
      %v711 = vpow.pop %v710
      %v712 = vmul.f32 %v684, 1.442695
      %v713 = vpow.pop %v712
      %v714 = vmul.f32 %v685, 1.442695
      %v715 = vpow.pop %v714
      %v716 = vmul.f32 %v686, 1.442695
      %v717 = vpow.pop %v716
      %v718 = vmul.f32 %v687, 1.442695
      %v719 = vpow.pop %v718
      %720 = vadd.xlane.f32.xlu0 %v689
      %v721 = vpop.xlane.xlu0 %720
      %722 = vadd.xlane.f32.xlu0 %v691
      %v723 = vpop.xlane.xlu0 %722
      %724 = vadd.xlane.f32.xlu0 %v693
      %v725 = vpop.xlane.xlu0 %724
      %726 = vadd.xlane.f32.xlu0 %v695
      %v727 = vpop.xlane.xlu0 %726
      %728 = vadd.xlane.f32.xlu0 %v697
      %v729 = vpop.xlane.xlu0 %728
      %730 = vadd.xlane.f32.xlu0 %v699
      %v731 = vpop.xlane.xlu0 %730
      %732 = vadd.xlane.f32.xlu0 %v701
      %v733 = vpop.xlane.xlu0 %732
      %734 = vadd.xlane.f32.xlu0 %v703
      %v735 = vpop.xlane.xlu0 %734
      %736 = vadd.xlane.f32.xlu0 %v705
      %v737 = vpop.xlane.xlu0 %736
      %738 = vadd.xlane.f32.xlu0 %v707
      %v739 = vpop.xlane.xlu0 %738
      %740 = vadd.xlane.f32.xlu0 %v709
      %v741 = vpop.xlane.xlu0 %740
      %742 = vadd.xlane.f32.xlu0 %v711
      %v743 = vpop.xlane.xlu0 %742
      %744 = vadd.xlane.f32.xlu0 %v713
      %v745 = vpop.xlane.xlu0 %744
      %746 = vadd.xlane.f32.xlu0 %v715
      %v747 = vpop.xlane.xlu0 %746
      %748 = vadd.xlane.f32.xlu0 %v717
      %v749 = vpop.xlane.xlu0 %748
      %750 = vadd.xlane.f32.xlu0 %v719
      %v751 = vpop.xlane.xlu0 %750
      %v752 = vadd.f32 %v576, %v721
      %v753 = vadd.f32 %v577, %v723
      %v754 = vadd.f32 %v578, %v725
      %v755 = vadd.f32 %v579, %v727
      %v756 = vadd.f32 %v580, %v729
      %v757 = vadd.f32 %v581, %v731
      %v758 = vadd.f32 %v582, %v733
      %v759 = vadd.f32 %v583, %v735
      %v760 = vadd.f32 %v584, %v737
      %v761 = vadd.f32 %v585, %v739
      %v762 = vadd.f32 %v586, %v741
      %v763 = vadd.f32 %v587, %v743
      %v764 = vadd.f32 %v588, %v745
      %v765 = vadd.f32 %v589, %v747
      %v766 = vadd.f32 %v590, %v749
      %v767 = vadd.f32 %v591, %v751
      %vm768 = vcmask 7168
      %769 = vst.msk [vmem:[#allocation3] sm:$0xff] %vm768, %v752
      %770 = vst.msk [vmem:[#allocation3 + $0x8] sm:$0xff] %vm768, %v753
      %771 = vst.msk [vmem:[#allocation3 + $0x10] sm:$0xff] %vm768, %v754
      %772 = vst.msk [vmem:[#allocation3 + $0x18] sm:$0xff] %vm768, %v755
      %773 = vst.msk [vmem:[#allocation3 + $0x20] sm:$0xff] %vm768, %v756
      %774 = vst.msk [vmem:[#allocation3 + $0x28] sm:$0xff] %vm768, %v757
      %775 = vst.msk [vmem:[#allocation3 + $0x30] sm:$0xff] %vm768, %v758
      %776 = vst.msk [vmem:[#allocation3 + $0x38] sm:$0xff] %vm768, %v759
      %777 = vst.msk [vmem:[#allocation3 + $0x40] sm:$0xff] %vm768, %v760
      %778 = vst.msk [vmem:[#allocation3 + $0x48] sm:$0xff] %vm768, %v761
      %779 = vst.msk [vmem:[#allocation3 + $0x50] sm:$0xff] %vm768, %v762
      %780 = vst.msk [vmem:[#allocation3 + $0x58] sm:$0xff] %vm768, %v763
      %781 = vst.msk [vmem:[#allocation3 + $0x60] sm:$0xff] %vm768, %v764
      %782 = vst.msk [vmem:[#allocation3 + $0x68] sm:$0xff] %vm768, %v765
      %783 = vst.msk [vmem:[#allocation3 + $0x70] sm:$0xff] %vm768, %v766
      %784 = vst.msk [vmem:[#allocation3 + $0x78] sm:$0xff] %vm768, %v767
      %785 = vst.msk [vmem:[#allocation2] sm:$0xff] %vm768, %v496
      %786 = vst.msk [vmem:[#allocation2 + $0x8] sm:$0xff] %vm768, %v497
      %787 = vst.msk [vmem:[#allocation2 + $0x10] sm:$0xff] %vm768, %v498
      %788 = vst.msk [vmem:[#allocation2 + $0x18] sm:$0xff] %vm768, %v499
      %789 = vst.msk [vmem:[#allocation2 + $0x20] sm:$0xff] %vm768, %v500
      %790 = vst.msk [vmem:[#allocation2 + $0x28] sm:$0xff] %vm768, %v501
      %791 = vst.msk [vmem:[#allocation2 + $0x30] sm:$0xff] %vm768, %v502
      %792 = vst.msk [vmem:[#allocation2 + $0x38] sm:$0xff] %vm768, %v503
      %793 = vst.msk [vmem:[#allocation2 + $0x40] sm:$0xff] %vm768, %v504
      %794 = vst.msk [vmem:[#allocation2 + $0x48] sm:$0xff] %vm768, %v505
      %795 = vst.msk [vmem:[#allocation2 + $0x50] sm:$0xff] %vm768, %v506
      %796 = vst.msk [vmem:[#allocation2 + $0x58] sm:$0xff] %vm768, %v507
      %797 = vst.msk [vmem:[#allocation2 + $0x60] sm:$0xff] %vm768, %v508
      %798 = vst.msk [vmem:[#allocation2 + $0x68] sm:$0xff] %vm768, %v509
      %799 = vst.msk [vmem:[#allocation2 + $0x70] sm:$0xff] %vm768, %v510
      %800 = vst.msk [vmem:[#allocation2 + $0x78] sm:$0xff] %vm768, %v511
      %s801 = sadd.s32 %s212, 128
      %p802 = scmp.lt.s32.totalorder %s447, %s801
      %s803 = sadd.s32 %s447, 128
      %p804 = scmp.lt.s32.totalorder %s212, %s803
      %p805 = pnand %p802, %p804
      %p806 = pneg %p805
      // Predicated region
      $region33: #{tpu_custom_call.1} parent=27 // pred_check
        _
      $region34: #{tpu_custom_call.1} parent=27 // pred_check_branch
        %808 = sbr.rel (%p805) target = $region36
      $region35: #{tpu_custom_call.1} parent=27 // pred_region
        %v809 = vlaneseq
        %v810 = vshrl.u32 %v809, 7
        %v811 = vadd.s32 %v810, 8
        %v812 = vadd.s32 %v810, 16
        %v813 = vadd.s32 %v810, 24
        %v814 = vadd.s32 %v810, 32
        %v815 = vadd.s32 %v810, 40
        %v816 = vadd.s32 %v810, 48
        %v817 = vadd.s32 %v810, 56
        %v818 = vadd.s32 %v810, 64
        %v819 = vadd.s32 %v810, 72
        %v820 = vadd.s32 %v810, 80
        %v821 = vadd.s32 %v810, 88
        %v822 = vadd.s32 %v810, 96
        %v823 = vadd.s32 %v810, 104
        %v824 = vadd.s32 %v810, 112
        %v825 = vadd.s32 %v810, 120
        %v826 = vstv %s447
        %v827 = vadd.s32 %v810, %v826
        %v828 = vadd.s32 %v811, %v826
        %v829 = vadd.s32 %v812, %v826
        %v830 = vadd.s32 %v813, %v826
        %v831 = vadd.s32 %v814, %v826
        %v832 = vadd.s32 %v815, %v826
        %v833 = vadd.s32 %v816, %v826
        %v834 = vadd.s32 %v817, %v826
        %v835 = vadd.s32 %v818, %v826
        %v836 = vadd.s32 %v819, %v826
        %v837 = vadd.s32 %v820, %v826
        %v838 = vadd.s32 %v821, %v826
        %v839 = vadd.s32 %v822, %v826
        %v840 = vadd.s32 %v823, %v826
        %v841 = vadd.s32 %v824, %v826
        %v842 = vadd.s32 %v825, %v826
        %v843 = vlaneseq
        %v844 = vand.u32 %v843, 127
        %v845 = vstv %s212
        %v846 = vadd.s32 %v844, %v845
        %v847 = vld [vmem:[#allocation4] sm:$0xff]
        %v848 = vld [vmem:[#allocation4 + $0x8] sm:$0xff]
        %v849 = vld [vmem:[#allocation4 + $0x10] sm:$0xff]
        %v850 = vld [vmem:[#allocation4 + $0x18] sm:$0xff]
        %v851 = vld [vmem:[#allocation4 + $0x20] sm:$0xff]
        %v852 = vld [vmem:[#allocation4 + $0x28] sm:$0xff]
        %v853 = vld [vmem:[#allocation4 + $0x30] sm:$0xff]
        %v854 = vld [vmem:[#allocation4 + $0x38] sm:$0xff]
        %v855 = vld [vmem:[#allocation4 + $0x40] sm:$0xff]
        %v856 = vld [vmem:[#allocation4 + $0x48] sm:$0xff]
        %v857 = vld [vmem:[#allocation4 + $0x50] sm:$0xff]
        %v858 = vld [vmem:[#allocation4 + $0x58] sm:$0xff]
        %v859 = vld [vmem:[#allocation4 + $0x60] sm:$0xff]
        %v860 = vld [vmem:[#allocation4 + $0x68] sm:$0xff]
        %v861 = vld [vmem:[#allocation4 + $0x70] sm:$0xff]
        %v862 = vld [vmem:[#allocation4 + $0x78] sm:$0xff]
        %vm863 = vcmp.eq.s32.totalorder %v827, %v846
        %vm864 = vcmp.eq.s32.totalorder %v828, %v846
        %vm865 = vcmp.eq.s32.totalorder %v829, %v846
        %vm866 = vcmp.eq.s32.totalorder %v830, %v846
        %vm867 = vcmp.eq.s32.totalorder %v831, %v846
        %vm868 = vcmp.eq.s32.totalorder %v832, %v846
        %vm869 = vcmp.eq.s32.totalorder %v833, %v846
        %vm870 = vcmp.eq.s32.totalorder %v834, %v846
        %vm871 = vcmp.eq.s32.totalorder %v835, %v846
        %vm872 = vcmp.eq.s32.totalorder %v836, %v846
        %vm873 = vcmp.eq.s32.totalorder %v837, %v846
        %vm874 = vcmp.eq.s32.totalorder %v838, %v846
        %vm875 = vcmp.eq.s32.totalorder %v839, %v846
        %vm876 = vcmp.eq.s32.totalorder %v840, %v846
        %vm877 = vcmp.eq.s32.totalorder %v841, %v846
        %vm878 = vcmp.eq.s32.totalorder %v842, %v846
        %v879 = vsel %vm863, %v431, 0.0
        %v880 = vsel %vm864, %v432, 0.0
        %v881 = vsel %vm865, %v433, 0.0
        %v882 = vsel %vm866, %v434, 0.0
        %v883 = vsel %vm867, %v435, 0.0
        %v884 = vsel %vm868, %v436, 0.0
        %v885 = vsel %vm869, %v437, 0.0
        %v886 = vsel %vm870, %v438, 0.0
        %v887 = vsel %vm871, %v439, 0.0
        %v888 = vsel %vm872, %v440, 0.0
        %v889 = vsel %vm873, %v441, 0.0
        %v890 = vsel %vm874, %v442, 0.0
        %v891 = vsel %vm875, %v443, 0.0
        %v892 = vsel %vm876, %v444, 0.0
        %v893 = vsel %vm877, %v445, 0.0
        %v894 = vsel %vm878, %v446, 0.0
        %895 = vadd.xlane.f32.xlu0 %v879
        %v896 = vpop.xlane.xlu0 %895
        %897 = vadd.xlane.f32.xlu0 %v880
        %v898 = vpop.xlane.xlu0 %897
        %899 = vadd.xlane.f32.xlu0 %v881
        %v900 = vpop.xlane.xlu0 %899
        %901 = vadd.xlane.f32.xlu0 %v882
        %v902 = vpop.xlane.xlu0 %901
        %903 = vadd.xlane.f32.xlu0 %v883
        %v904 = vpop.xlane.xlu0 %903
        %905 = vadd.xlane.f32.xlu0 %v884
        %v906 = vpop.xlane.xlu0 %905
        %907 = vadd.xlane.f32.xlu0 %v885
        %v908 = vpop.xlane.xlu0 %907
        %909 = vadd.xlane.f32.xlu0 %v886
        %v910 = vpop.xlane.xlu0 %909
        %911 = vadd.xlane.f32.xlu0 %v887
        %v912 = vpop.xlane.xlu0 %911
        %913 = vadd.xlane.f32.xlu0 %v888
        %v914 = vpop.xlane.xlu0 %913
        %915 = vadd.xlane.f32.xlu0 %v889
        %v916 = vpop.xlane.xlu0 %915
        %917 = vadd.xlane.f32.xlu0 %v890
        %v918 = vpop.xlane.xlu0 %917
        %919 = vadd.xlane.f32.xlu0 %v891
        %v920 = vpop.xlane.xlu0 %919
        %921 = vadd.xlane.f32.xlu0 %v892
        %v922 = vpop.xlane.xlu0 %921
        %923 = vadd.xlane.f32.xlu0 %v893
        %v924 = vpop.xlane.xlu0 %923
        %925 = vadd.xlane.f32.xlu0 %v894
        %v926 = vpop.xlane.xlu0 %925
        %v927 = vadd.f32 %v847, %v896
        %v928 = vadd.f32 %v848, %v898
        %v929 = vadd.f32 %v849, %v900
        %v930 = vadd.f32 %v850, %v902
        %v931 = vadd.f32 %v851, %v904
        %v932 = vadd.f32 %v852, %v906
        %v933 = vadd.f32 %v853, %v908
        %v934 = vadd.f32 %v854, %v910
        %v935 = vadd.f32 %v855, %v912
        %v936 = vadd.f32 %v856, %v914
        %v937 = vadd.f32 %v857, %v916
        %v938 = vadd.f32 %v858, %v918
        %v939 = vadd.f32 %v859, %v920
        %v940 = vadd.f32 %v860, %v922
        %v941 = vadd.f32 %v861, %v924
        %v942 = vadd.f32 %v862, %v926
        %943 = vst.msk [vmem:[#allocation4] sm:$0xff] %vm768, %v927
        %944 = vst.msk [vmem:[#allocation4 + $0x8] sm:$0xff] %vm768, %v928
        %945 = vst.msk [vmem:[#allocation4 + $0x10] sm:$0xff] %vm768, %v929
        %946 = vst.msk [vmem:[#allocation4 + $0x18] sm:$0xff] %vm768, %v930
        %947 = vst.msk [vmem:[#allocation4 + $0x20] sm:$0xff] %vm768, %v931
        %948 = vst.msk [vmem:[#allocation4 + $0x28] sm:$0xff] %vm768, %v932
        %949 = vst.msk [vmem:[#allocation4 + $0x30] sm:$0xff] %vm768, %v933
        %950 = vst.msk [vmem:[#allocation4 + $0x38] sm:$0xff] %vm768, %v934
        %951 = vst.msk [vmem:[#allocation4 + $0x40] sm:$0xff] %vm768, %v935
        %952 = vst.msk [vmem:[#allocation4 + $0x48] sm:$0xff] %vm768, %v936
        %953 = vst.msk [vmem:[#allocation4 + $0x50] sm:$0xff] %vm768, %v937
        %954 = vst.msk [vmem:[#allocation4 + $0x58] sm:$0xff] %vm768, %v938
        %955 = vst.msk [vmem:[#allocation4 + $0x60] sm:$0xff] %vm768, %v939
        %956 = vst.msk [vmem:[#allocation4 + $0x68] sm:$0xff] %vm768, %v940
        %957 = vst.msk [vmem:[#allocation4 + $0x70] sm:$0xff] %vm768, %v941
        %958 = vst.msk [vmem:[#allocation4 + $0x78] sm:$0xff] %vm768, %v942
      $region36: #{tpu_custom_call.1} parent=27 // pred_fallthru
        _
      %p959 = scmp.eq.s32.totalorder %s18, 1
      // Predicated region
      $region37: #{tpu_custom_call.1} parent=27 // pred_check
        %p960 = pneg %p959
      $region38: #{tpu_custom_call.1} parent=27 // pred_check_branch
        %962 = sbr.rel (%p960) target = $region40
      $region39: #{tpu_custom_call.1} parent=27 // pred_region
        %v963 = vld [vmem:[#allocation2] sm:$0xff]
        %v964 = vld [vmem:[#allocation2 + $0x8] sm:$0xff]
        %v965 = vld [vmem:[#allocation2 + $0x10] sm:$0xff]
        %v966 = vld [vmem:[#allocation2 + $0x18] sm:$0xff]
        %v967 = vld [vmem:[#allocation2 + $0x20] sm:$0xff]
        %v968 = vld [vmem:[#allocation2 + $0x28] sm:$0xff]
        %v969 = vld [vmem:[#allocation2 + $0x30] sm:$0xff]
        %v970 = vld [vmem:[#allocation2 + $0x38] sm:$0xff]
        %v971 = vld [vmem:[#allocation2 + $0x40] sm:$0xff]
        %v972 = vld [vmem:[#allocation2 + $0x48] sm:$0xff]
        %v973 = vld [vmem:[#allocation2 + $0x50] sm:$0xff]
        %v974 = vld [vmem:[#allocation2 + $0x58] sm:$0xff]
        %v975 = vld [vmem:[#allocation2 + $0x60] sm:$0xff]
        %v976 = vld [vmem:[#allocation2 + $0x68] sm:$0xff]
        %v977 = vld [vmem:[#allocation2 + $0x70] sm:$0xff]
        %v978 = vld [vmem:[#allocation2 + $0x78] sm:$0xff]
        %v979 = vld [vmem:[#allocation3] sm:$0xff]
        %v980 = vld [vmem:[#allocation3 + $0x8] sm:$0xff]
        %v981 = vld [vmem:[#allocation3 + $0x10] sm:$0xff]
        %v982 = vld [vmem:[#allocation3 + $0x18] sm:$0xff]
        %v983 = vld [vmem:[#allocation3 + $0x20] sm:$0xff]
        %v984 = vld [vmem:[#allocation3 + $0x28] sm:$0xff]
        %v985 = vld [vmem:[#allocation3 + $0x30] sm:$0xff]
        %v986 = vld [vmem:[#allocation3 + $0x38] sm:$0xff]
        %v987 = vld [vmem:[#allocation3 + $0x40] sm:$0xff]
        %v988 = vld [vmem:[#allocation3 + $0x48] sm:$0xff]
        %v989 = vld [vmem:[#allocation3 + $0x50] sm:$0xff]
        %v990 = vld [vmem:[#allocation3 + $0x58] sm:$0xff]
        %v991 = vld [vmem:[#allocation3 + $0x60] sm:$0xff]
        %v992 = vld [vmem:[#allocation3 + $0x68] sm:$0xff]
        %v993 = vld [vmem:[#allocation3 + $0x70] sm:$0xff]
        %v994 = vld [vmem:[#allocation3 + $0x78] sm:$0xff]
        %v995 = vlog2.pop %v979
        %v996 = vmul.f32 %v995, 0.6931472
        %v997 = vlog2.pop %v980
        %v998 = vmul.f32 %v997, 0.6931472
        %v999 = vlog2.pop %v981
        %v1000 = vmul.f32 %v999, 0.6931472
        %v1001 = vlog2.pop %v982
        %v1002 = vmul.f32 %v1001, 0.6931472
        %v1003 = vlog2.pop %v983
        %v1004 = vmul.f32 %v1003, 0.6931472
        %v1005 = vlog2.pop %v984
        %v1006 = vmul.f32 %v1005, 0.6931472
        %v1007 = vlog2.pop %v985
        %v1008 = vmul.f32 %v1007, 0.6931472
        %v1009 = vlog2.pop %v986
        %v1010 = vmul.f32 %v1009, 0.6931472
        %v1011 = vlog2.pop %v987
        %v1012 = vmul.f32 %v1011, 0.6931472
        %v1013 = vlog2.pop %v988
        %v1014 = vmul.f32 %v1013, 0.6931472
        %v1015 = vlog2.pop %v989
        %v1016 = vmul.f32 %v1015, 0.6931472
        %v1017 = vlog2.pop %v990
        %v1018 = vmul.f32 %v1017, 0.6931472
        %v1019 = vlog2.pop %v991
        %v1020 = vmul.f32 %v1019, 0.6931472
        %v1021 = vlog2.pop %v992
        %v1022 = vmul.f32 %v1021, 0.6931472
        %v1023 = vlog2.pop %v993
        %v1024 = vmul.f32 %v1023, 0.6931472
        %v1025 = vlog2.pop %v994
        %v1026 = vmul.f32 %v1025, 0.6931472
        %v1027 = vadd.f32 %v963, %v996
        %v1028 = vadd.f32 %v964, %v998
        %v1029 = vadd.f32 %v965, %v1000
        %v1030 = vadd.f32 %v966, %v1002
        %v1031 = vadd.f32 %v967, %v1004
        %v1032 = vadd.f32 %v968, %v1006
        %v1033 = vadd.f32 %v969, %v1008
        %v1034 = vadd.f32 %v970, %v1010
        %v1035 = vadd.f32 %v971, %v1012
        %v1036 = vadd.f32 %v972, %v1014
        %v1037 = vadd.f32 %v973, %v1016
        %v1038 = vadd.f32 %v974, %v1018
        %v1039 = vadd.f32 %v975, %v1020
        %v1040 = vadd.f32 %v976, %v1022
        %v1041 = vadd.f32 %v977, %v1024
        %v1042 = vadd.f32 %v978, %v1026
        %v1043 = vld [vmem:[#allocation4] sm:$0xff]
        %v1044 = vld [vmem:[#allocation4 + $0x8] sm:$0xff]
        %v1045 = vld [vmem:[#allocation4 + $0x10] sm:$0xff]
        %v1046 = vld [vmem:[#allocation4 + $0x18] sm:$0xff]
        %v1047 = vld [vmem:[#allocation4 + $0x20] sm:$0xff]
        %v1048 = vld [vmem:[#allocation4 + $0x28] sm:$0xff]
        %v1049 = vld [vmem:[#allocation4 + $0x30] sm:$0xff]
        %v1050 = vld [vmem:[#allocation4 + $0x38] sm:$0xff]
        %v1051 = vld [vmem:[#allocation4 + $0x40] sm:$0xff]
        %v1052 = vld [vmem:[#allocation4 + $0x48] sm:$0xff]
        %v1053 = vld [vmem:[#allocation4 + $0x50] sm:$0xff]
        %v1054 = vld [vmem:[#allocation4 + $0x58] sm:$0xff]
        %v1055 = vld [vmem:[#allocation4 + $0x60] sm:$0xff]
        %v1056 = vld [vmem:[#allocation4 + $0x68] sm:$0xff]
        %v1057 = vld [vmem:[#allocation4 + $0x70] sm:$0xff]
        %v1058 = vld [vmem:[#allocation4 + $0x78] sm:$0xff]
        %v1059 = vsub.f32 %v1027, %v1043
        %v1060 = vsub.f32 %v1028, %v1044
        %v1061 = vsub.f32 %v1029, %v1045
        %v1062 = vsub.f32 %v1030, %v1046
        %v1063 = vsub.f32 %v1031, %v1047
        %v1064 = vsub.f32 %v1032, %v1048
        %v1065 = vsub.f32 %v1033, %v1049
        %v1066 = vsub.f32 %v1034, %v1050
        %v1067 = vsub.f32 %v1035, %v1051
        %v1068 = vsub.f32 %v1036, %v1052
        %v1069 = vsub.f32 %v1037, %v1053
        %v1070 = vsub.f32 %v1038, %v1054
        %v1071 = vsub.f32 %v1039, %v1055
        %v1072 = vsub.f32 %v1040, %v1056
        %v1073 = vsub.f32 %v1041, %v1057
        %v1074 = vsub.f32 %v1042, %v1058
        %1075 = vst.msk [vmem:[%s157] sm:$0xff] %vm768, %v1059
        %1076 = vst.msk [vmem:[%s157 + $0x8] sm:$0xff] %vm768, %v1060
        %1077 = vst.msk [vmem:[%s157 + $0x10] sm:$0xff] %vm768, %v1061
        %1078 = vst.msk [vmem:[%s157 + $0x18] sm:$0xff] %vm768, %v1062
        %1079 = vst.msk [vmem:[%s157 + $0x20] sm:$0xff] %vm768, %v1063
        %1080 = vst.msk [vmem:[%s157 + $0x28] sm:$0xff] %vm768, %v1064
        %1081 = vst.msk [vmem:[%s157 + $0x30] sm:$0xff] %vm768, %v1065
        %1082 = vst.msk [vmem:[%s157 + $0x38] sm:$0xff] %vm768, %v1066
        %1083 = vst.msk [vmem:[%s157 + $0x40] sm:$0xff] %vm768, %v1067
        %1084 = vst.msk [vmem:[%s157 + $0x48] sm:$0xff] %vm768, %v1068
        %1085 = vst.msk [vmem:[%s157 + $0x50] sm:$0xff] %vm768, %v1069
        %1086 = vst.msk [vmem:[%s157 + $0x58] sm:$0xff] %vm768, %v1070
        %1087 = vst.msk [vmem:[%s157 + $0x60] sm:$0xff] %vm768, %v1071
        %1088 = vst.msk [vmem:[%s157 + $0x68] sm:$0xff] %vm768, %v1072
        %1089 = vst.msk [vmem:[%s157 + $0x70] sm:$0xff] %vm768, %v1073
        %1090 = vst.msk [vmem:[%s157 + $0x78] sm:$0xff] %vm768, %v1074
      $region40: #{tpu_custom_call.1} parent=27 // pred_fallthru
        _
      %s1091 = smul.u32 16, %s17
      %p1092 = scmp.lt.s32.totalorder %s1091, 31
      %s1093 = scalar_select %p1092, %s1091, 31
      %s1094 = smul.addr %s1093, 8
      %s1095 = scalar_lea.vmem %s2, %s1094
      // Predicated region
      $region41: #{tpu_custom_call.1} parent=27 // pred_check
        %p1096 = pneg %p90
      $region42: #{tpu_custom_call.1} parent=27 // pred_check_branch
        %1098 = sbr.rel (%p1096) target = $region44
      $region43: #{tpu_custom_call.1} parent=27 // pred_region
        %s1099 = smul.u32 16, %s17
      $region44: #{tpu_custom_call.1} parent=27 // pred_fallthru
        _
    $region28: #{tpu_custom_call.1} parent=5 // pred_fallthru
      _
    %p1100 = scmp.le.s32.totalorder 2, %s8
    // Predicated region
    $region45: #{tpu_custom_call.1} parent=5 // pred_check
      %p1101 = pneg %p1100
    $region46: #{tpu_custom_call.1} parent=5 // pred_check_branch
      %1103 = sbr.rel (%p1101) target = $region48
    $region47: #{tpu_custom_call.1} parent=5 // pred_region
      %s1104 = ssub.s32 %s8, 2
      // Predicated region
      $region49: #{tpu_custom_call.1} parent=47 // pred_check
        %p1105 = pneg %p96
      $region50: #{tpu_custom_call.1} parent=47 // pred_check_branch
        %1107 = sbr.rel (%p1105) target = $region52
      $region51: #{tpu_custom_call.1} parent=47 // pred_region
        %s1108 = smul.u32 16, %s19
        %p1109 = scmp.lt.s32.totalorder %s1108, 31
        %s1110 = scalar_select %p1109, %s1108, 31
        %s1111 = smul.addr %s1110, 8
        %s1112 = scalar_lea.vmem %s2, %s1111
      $region52: #{tpu_custom_call.1} parent=47 // pred_fallthru
        _
    $region48: #{tpu_custom_call.1} parent=5 // pred_fallthru
      _
  $region6: #{tpu_custom_call.1} parent=0 // loop_footer
    %s12 = sadd.s32 1, %s8
  $region7: #{tpu_custom_call.1} parent=0 // loop_footer_branch
    %7 = sbr.rel target = $region3
  $region8: #{tpu_custom_call.1} parent=0 // loop_exit
    _

</llo_original>
